<compile_context>
chip_gen: v7x
topology: tpu7x:2x2x1
jax: 0.10.0
libtpu: 0.0.40
codegen_flags: <defaults>
</compile_context>

<pallas_src>
import functools

import jax
import jax.numpy as jnp
from jax.experimental import pallas as pl
from jax.experimental.pallas import tpu as pltpu

_LANE = 128


def _round_up(x, m):
    return ((x + m - 1) // m) * m


def _vmem_capacity_bytes():
    try:
        cap = getattr(pltpu.get_tpu_info(), "vmem_capacity_bytes", None)
        if cap:
            return int(cap)
    except Exception:
        pass
    return 64 << 20  # v7x per-TensorCore VMEM: the smallest of current chips.


# ---------------------------------------------------------------------------
# Fused single-pass kernel: pool + squeeze + excite + rescale of one x block.
# ---------------------------------------------------------------------------
def _se_fused_kernel(x_ref, w1t_ref, b1_ref, w2t_ref, b2_ref, o_ref, *, inv_hw):
    # x_ref / o_ref : (NB, C, HW_pad) in the input dtype
    # w1t_ref: (C, R) f32   b1_ref: (1, R) f32
    # w2t_ref: (R, C) f32   b2_ref: (1, C) f32
    x = x_ref[...]

    # Global average pool over the spatial (lane) axis. Padded lanes are zero,
    # so sum * (1 / real_HW) is the exact mean. f32 accumulation without a
    # full-block f32 temp.
    s = jnp.sum(x, axis=-1, dtype=jnp.float32) * jnp.float32(inv_hw)     # (NB, C)

    # Squeeze 1x1 conv == MXU matmul, bias, Swish.
    s1 = jnp.dot(s, w1t_ref[...], preferred_element_type=jnp.float32)
    s1 = s1 + b1_ref[...]
    s1 = s1 * jax.nn.sigmoid(s1)                                         # (NB, R)

    # Excite 1x1 conv == MXU matmul, bias, sigmoid gate.
    s2 = jnp.dot(s1, w2t_ref[...], preferred_element_type=jnp.float32)
    s2 = jax.nn.sigmoid(s2 + b2_ref[...])                                # (NB, C)

    # Rescale in the input dtype (no full-block f32 upcast of x).
    gate = s2.astype(x.dtype)[:, :, None]                                # (NB, C, 1)
    o_ref[...] = x * gate


# ---------------------------------------------------------------------------
# Two-phase fallback kernels (single sample too large for one VMEM block).
# ---------------------------------------------------------------------------
def _se_pool_gate_kernel(x_ref, w1t_ref, b1_ref, w2t_ref, b2_ref, gate_ref,
                         acc_ref, *, inv_hw):
    # Phase 1: spatially tiled pool (accumulate over grid axis 1), then the
    # tiny squeeze/excite MLP -> per-(batch, channel) gate.
    # x_ref: (1, C, THW); gate_ref: (1, C, 1); acc_ref: (1, C) f32 scratch.
    t = pl.program_id(1)

    @pl.when(t == 0)
    def _():
        acc_ref[...] = jnp.zeros_like(acc_ref)

    acc_ref[...] += jnp.sum(x_ref[...], axis=-1, dtype=jnp.float32)

    @pl.when(t == pl.num_programs(1) - 1)
    def _():
        s = acc_ref[...] * jnp.float32(inv_hw)                           # (1, C)
        s1 = jnp.dot(s, w1t_ref[...], preferred_element_type=jnp.float32)
        s1 = s1 + b1_ref[...]
        s1 = s1 * jax.nn.sigmoid(s1)
        s2 = jnp.dot(s1, w2t_ref[...], preferred_element_type=jnp.float32)
        s2 = jax.nn.sigmoid(s2 + b2_ref[...])                            # (1, C)
        gate_ref[...] = s2.astype(gate_ref.dtype)[:, :, None]            # (1, C, 1)


def _se_rescale_kernel(x_ref, gate_ref, o_ref):
    # Phase 2: stream x again, apply the gate (stays in the input dtype).
    o_ref[...] = x_ref[...] * gate_ref[...]


def _squeeze_excite_two_phase(x_flat, w1t, b1_2d, w2t, b2_2d, *, hw,
                              block_budget, vmem_cap):
    N, C, HW_pad = x_flat.shape
    R = w1t.shape[1]
    itemsize = jnp.dtype(x_flat.dtype).itemsize

    # Spatial tile: largest multiple of 128 that divides HW_pad and fits the
    # per-step block budget.
    max_lanes = max(_LANE, (block_budget // (C * itemsize)) // _LANE * _LANE)
    n_lane_blocks = HW_pad // _LANE
    k = 1
    for d in range(1, n_lane_blocks + 1):
        if n_lane_blocks % d == 0 and _LANE * d <= max_lanes:
            k = d
    thw = _LANE * k
    n_t = HW_pad // thw

    block_bytes = C * thw * itemsize
    vmem_limit = int(min(vmem_cap * 0.9,
                         max(16 << 20, 5 * block_bytes + (4 << 20))))

    gate = pl.pallas_call(
        functools.partial(_se_pool_gate_kernel, inv_hw=1.0 / hw),
        out_shape=jax.ShapeDtypeStruct((N, C, 1), x_flat.dtype),
        grid_spec=pltpu.PrefetchScalarGridSpec(
            num_scalar_prefetch=0,
            grid=(N, n_t),
            in_specs=[
                pl.BlockSpec((1, C, thw), lambda b, t: (b, 0, t)),
                pl.BlockSpec((C, R), lambda b, t: (0, 0)),
                pl.BlockSpec((1, R), lambda b, t: (0, 0)),
                pl.BlockSpec((R, C), lambda b, t: (0, 0)),
                pl.BlockSpec((1, C), lambda b, t: (0, 0)),
            ],
            out_specs=pl.BlockSpec((1, C, 1), lambda b, t: (b, 0, 0)),
            scratch_shapes=[pltpu.VMEM((1, C), jnp.float32)],
        ),
        compiler_params=pltpu.CompilerParams(
            dimension_semantics=("parallel", "arbitrary"),
            vmem_limit_bytes=vmem_limit),
    )(x_flat, w1t, b1_2d, w2t, b2_2d)

    out_flat = pl.pallas_call(
        _se_rescale_kernel,
        out_shape=jax.ShapeDtypeStruct((N, C, HW_pad), x_flat.dtype),
        grid_spec=pltpu.PrefetchScalarGridSpec(
            num_scalar_prefetch=0,
            grid=(N, n_t),
            in_specs=[
                pl.BlockSpec((1, C, thw), lambda b, t: (b, 0, t)),
                pl.BlockSpec((1, C, 1), lambda b, t: (b, 0, 0)),
            ],
            out_specs=pl.BlockSpec((1, C, thw), lambda b, t: (b, 0, t)),
        ),
        compiler_params=pltpu.CompilerParams(
            dimension_semantics=("parallel", "parallel"),
            vmem_limit_bytes=vmem_limit),
    )(x_flat, gate)
    return out_flat


# ---------------------------------------------------------------------------
# Public wrapper.
# ---------------------------------------------------------------------------
def squeeze_excite(x, w1, b1, w2, b2, *,
                   vmem_budget_bytes=8 << 20,
                   min_block_bytes=512 << 10,
                   two_phase_threshold_bytes=None):
    """Matches PyTorch SqueezeExcite.forward with IS_GATHER_EXCITE=False.

    x: (N, C, H, W); w1: (R, C) squeeze weight; b1: (R,); w2: (C, R); b2: (C,).
      s = adaptive_avg_pool2d(x, 1); s = swish(conv1x1(s)); s = sigmoid(conv1x1(s));
      return s * x
    """
    N, C, H, W = x.shape
    R = w1.shape[0]
    HW = H * W
    HW_pad = _round_up(HW, _LANE)

    # Lane-dense layout: flatten spatial, zero-pad to a 128 multiple so the
    # rescale store is unmasked. Zero padding does not perturb the pooled mean
    # (we divide by the real HW).
    x_flat = x.reshape(N, C, HW)
    if HW_pad != HW:
        x_flat = jnp.pad(x_flat, ((0, 0), (0, 0), (0, HW_pad - HW)))

    itemsize = jnp.dtype(x.dtype).itemsize
    per_sample = C * HW_pad * itemsize
    weight_bytes = (2 * C * R + R + C) * 4

    # Real per-step footprint ~= 4x block (double-buffered in + out) + weights.
    vmem_cap = _vmem_capacity_bytes()
    soft_block_cap = max((vmem_budget_bytes - 2 * weight_bytes) // 4,
                         min_block_bytes)
    hard_block_cap = max((int(vmem_cap * 0.75) - 2 * weight_bytes) // 4,
                         min_block_bytes)
    block_budget = min(soft_block_cap, hard_block_cap)
    if two_phase_threshold_bytes is None:
        two_phase_threshold_bytes = hard_block_cap

    # Pre-transpose + pre-cast weights so the in-kernel dots need no
    # transpose and no per-step casts.
    w1t = jnp.transpose(w1).astype(jnp.float32)        # (C, R)
    w2t = jnp.transpose(w2).astype(jnp.float32)        # (R, C)
    b1_2d = b1.reshape(1, R).astype(jnp.float32)
    b2_2d = b2.reshape(1, C).astype(jnp.float32)

    if per_sample > two_phase_threshold_bytes:
        # Single-sample block would blow past VMEM: spatially tiled fallback.
        out_flat = _squeeze_excite_two_phase(
            x_flat, w1t, b1_2d, w2t, b2_2d,
            hw=HW, block_budget=block_budget, vmem_cap=vmem_cap)
    else:
        # Pick NB (batch samples per grid step). Prefer >= 4 and even grid
        # steps (>= 2 pipelined steps per TensorCore on v7x megacore), but
        # never shrink a block below min_block_bytes just to get more steps —
        # per-grid-step overhead (~0.35 us) dominates tiny blocks.
        divisors = [d for d in range(1, N + 1) if N % d == 0]
        fitting = [d for d in divisors if d * per_sample <= block_budget] or [1]
        steps = lambda d: N // d
        big_enough = [d for d in fitting if d * per_sample >= min_block_bytes]
        nb = None
        for good in (
            lambda d: steps(d) >= 4 and steps(d) % 2 == 0,
            lambda d: steps(d) >= 2 and steps(d) % 2 == 0,
            lambda d: steps(d) >= 2,
        ):
            cands = [d for d in big_enough if good(d)]
            if cands:
                nb = max(cands)
                break
        if nb is None:
            nb = max(fitting)   # tiny input: one big step beats several tiny ones

        block_bytes = nb * per_sample
        vmem_limit = int(min(vmem_cap * 0.9,
                             max(16 << 20,
                                 5 * block_bytes + 4 * weight_bytes + (2 << 20))))
        # Note: for many small blocks on v6e one could bump the x input to
        # pipeline_mode=pl.Buffered(3); left at the default double buffer.

        out_flat = pl.pallas_call(
            functools.partial(_se_fused_kernel, inv_hw=1.0 / HW),
            out_shape=jax.ShapeDtypeStruct((N, C, HW_pad), x.dtype),
            grid_spec=pltpu.PrefetchScalarGridSpec(
                num_scalar_prefetch=0,
                grid=(N // nb,),
                in_specs=[
                    pl.BlockSpec((nb, C, HW_pad), lambda b: (b, 0, 0)),
                    pl.BlockSpec((C, R), lambda b: (0, 0)),
                    pl.BlockSpec((1, R), lambda b: (0, 0)),
                    pl.BlockSpec((R, C), lambda b: (0, 0)),
                    pl.BlockSpec((1, C), lambda b: (0, 0)),
                ],
                out_specs=pl.BlockSpec((nb, C, HW_pad), lambda b: (b, 0, 0)),
            ),
            compiler_params=pltpu.CompilerParams(
                dimension_semantics=("parallel",),
                vmem_limit_bytes=vmem_limit),
        )(x_flat, w1t, b1_2d, w2t, b2_2d)

    if HW_pad != HW:
        out_flat = out_flat[:, :, :HW]
    return out_flat.reshape(N, C, H, W)


def squeeze_excite_ref(x, w1, b1, w2, b2):
    # Pure-JAX reference matching the PyTorch forward (IS_GATHER_EXCITE=False).
    s = jnp.mean(x.astype(jnp.float32), axis=(2, 3))                      # (N, C)
    s1 = jnp.dot(s, w1.astype(jnp.float32).T) + b1.astype(jnp.float32)    # (N, R)
    s1 = s1 * jax.nn.sigmoid(s1)
    s2 = jax.nn.sigmoid(jnp.dot(s1, w2.astype(jnp.float32).T)
                        + b2.astype(jnp.float32))                         # (N, C)
    return x * s2.astype(x.dtype)[:, :, None, None]


if __name__ == "__main__":
    key = jax.random.PRNGKey(0)

    def make_inputs(k, n, c, r, h, w):
        kx, kw1, kb1, kw2, kb2 = jax.random.split(k, 5)
        x = jax.random.normal(kx, (n, c, h, w), dtype=jnp.float32)
        # 1x1 conv weights flattened to matrices (PyTorch (R,C,1,1)/(C,R,1,1)).
        w1 = jax.random.normal(kw1, (r, c), dtype=jnp.float32) * 0.5   # squeeze.weight
        b1 = jax.random.normal(kb1, (r,), dtype=jnp.float32) * 0.1     # squeeze.bias
        w2 = jax.random.normal(kw2, (c, r), dtype=jnp.float32) * 0.5   # excite.weight
        b2 = jax.random.normal(kb2, (c,), dtype=jnp.float32) * 0.1     # excite.bias
        return x, w1, b1, w2, b2

    k1, k2, k3 = jax.random.split(key, 3)

    # 1) Main small case: batch=2, in_channel=4, reduction=2, spatial=16x16.
    x, w1, b1, w2, b2 = make_inputs(k1, 2, 4, 2, 16, 16)
    out = jax.block_until_ready(squeeze_excite(x, w1, b1, w2, b2))
    ref = squeeze_excite_ref(x, w1, b1, w2, b2)
    assert out.shape == x.shape
    assert jnp.allclose(out, ref, atol=2e-3, rtol=2e-3), "fused path mismatch"

    # 2) Ragged spatial (HW = 49, not a 128 multiple): exercises lane padding.
    x, w1, b1, w2, b2 = make_inputs(k2, 4, 8, 4, 7, 7)
    out = jax.block_until_ready(squeeze_excite(x, w1, b1, w2, b2))
    ref = squeeze_excite_ref(x, w1, b1, w2, b2)
    assert jnp.allclose(out, ref, atol=2e-3, rtol=2e-3), "padded path mismatch"

    # 3) Force the two-phase (spatially tiled) fallback on a small input.
    x, w1, b1, w2, b2 = make_inputs(k3, 2, 8, 2, 16, 16)
    out = jax.block_until_ready(
        squeeze_excite(x, w1, b1, w2, b2,
                       vmem_budget_bytes=16 << 10,
                       min_block_bytes=4 << 10,
                       two_phase_threshold_bytes=1))
    ref = squeeze_excite_ref(x, w1, b1, w2, b2)
    assert jnp.allclose(out, ref, atol=2e-3, rtol=2e-3), "two-phase path mismatch"

    print("KERNEL_OK")
</pallas_src>

<mosaic_0001>
module attributes {stable_mosaic.version = 11 : i64} {
  func.func @_se_fused_kernel(%arg0: i32, %arg1: memref<2x4x256xf32, #tpu.memory_space<vmem>>, %arg2: memref<4x2xf32, #tpu.memory_space<vmem>>, %arg3: memref<1x2xf32, #tpu.memory_space<vmem>>, %arg4: memref<2x4xf32, #tpu.memory_space<vmem>>, %arg5: memref<1x4xf32, #tpu.memory_space<vmem>>, %arg6: memref<2x4x256xf32, #tpu.memory_space<vmem>>) attributes {dimension_semantics = [#tpu.dimension_semantics<parallel>], iteration_bounds = array<i64: 1>, scalar_prefetch = 0 : i64, scratch_operands = 0 : i64, tpu.core_type = #tpu.core_type<tc>, window_params = [{transform_indices = @transform_0, window_bounds = array<i64: 2, 4, 256>}, {pipeline_mode = #tpu.pipeline_mode<synchronous>, transform_indices = @transform_1, window_bounds = array<i64: 4, 2>}, {pipeline_mode = #tpu.pipeline_mode<synchronous>, transform_indices = @transform_2, window_bounds = array<i64: 1, 2>}, {pipeline_mode = #tpu.pipeline_mode<synchronous>, transform_indices = @transform_3, window_bounds = array<i64: 2, 4>}, {pipeline_mode = #tpu.pipeline_mode<synchronous>, transform_indices = @transform_4, window_bounds = array<i64: 1, 4>}, {transform_indices = @transform_5, window_bounds = array<i64: 2, 4, 256>}]} {
    %c0 = arith.constant 0 : index
    %c0_0 = arith.constant 0 : index
    %c0_1 = arith.constant 0 : index
    %0 = vector.load %arg1[%c0, %c0_0, %c0_1] : memref<2x4x256xf32, #tpu.memory_space<vmem>>, vector<2x4x256xf32>
    %cst = arith.constant dense<0.000000e+00> : vector<2x4xf32>
    %1 = vector.multi_reduction <add>, %0, %cst [2] : vector<2x4x256xf32> to vector<2x4xf32>
    %cst_2 = arith.constant 3.906250e-03 : f32
    %2 = vector.broadcast %cst_2 : f32 to vector<2x4xf32>
    %3 = arith.mulf %1, %2 : vector<2x4xf32>
    %c0_3 = arith.constant 0 : index
    %c0_4 = arith.constant 0 : index
    %4 = vector.load %arg2[%c0_3, %c0_4] : memref<4x2xf32, #tpu.memory_space<vmem>>, vector<4x2xf32>
    %cst_5 = arith.constant dense<0.000000e+00> : vector<2x2xf32>
    %5 = tpu.matmul %3, %4, %cst_5 {dimension_numbers = #tpu.dot_dimension_numbers<[1], [0], [0], [1], [0, 0, 1, 1], [], []>} : vector<2x4xf32>, vector<4x2xf32>, vector<2x2xf32> -> vector<2x2xf32>
    %c0_6 = arith.constant 0 : index
    %c0_7 = arith.constant 0 : index
    %6 = vector.load %arg3[%c0_6, %c0_7] : memref<1x2xf32, #tpu.memory_space<vmem>>, vector<1x2xf32>
    %7 = vector.broadcast %6 : vector<1x2xf32> to vector<2x2xf32>
    %8 = arith.addf %5, %7 : vector<2x2xf32>
    %9 = arith.negf %8 : vector<2x2xf32>
    %10 = math.exp %9 : vector<2x2xf32>
    %cst_8 = arith.constant 1.000000e+00 : f32
    %11 = vector.broadcast %cst_8 : f32 to vector<2x2xf32>
    %12 = arith.addf %11, %10 : vector<2x2xf32>
    %13 = arith.divf %11, %12 : vector<2x2xf32>
    %14 = arith.mulf %8, %13 : vector<2x2xf32>
    %c0_9 = arith.constant 0 : index
    %c0_10 = arith.constant 0 : index
    %15 = vector.load %arg4[%c0_9, %c0_10] : memref<2x4xf32, #tpu.memory_space<vmem>>, vector<2x4xf32>
    %cst_11 = arith.constant dense<0.000000e+00> : vector<2x4xf32>
    %16 = tpu.matmul %14, %15, %cst_11 {dimension_numbers = #tpu.dot_dimension_numbers<[1], [0], [0], [1], [0, 0, 1, 1], [], []>} : vector<2x2xf32>, vector<2x4xf32>, vector<2x4xf32> -> vector<2x4xf32>
    %c0_12 = arith.constant 0 : index
    %c0_13 = arith.constant 0 : index
    %17 = vector.load %arg5[%c0_12, %c0_13] : memref<1x4xf32, #tpu.memory_space<vmem>>, vector<1x4xf32>
    %18 = vector.broadcast %17 : vector<1x4xf32> to vector<2x4xf32>
    %19 = arith.addf %16, %18 : vector<2x4xf32>
    %20 = arith.negf %19 : vector<2x4xf32>
    %21 = math.exp %20 : vector<2x4xf32>
    %cst_14 = arith.constant 1.000000e+00 : f32
    %22 = vector.broadcast %cst_14 : f32 to vector<2x4xf32>
    %23 = arith.addf %22, %21 : vector<2x4xf32>
    %24 = arith.divf %22, %23 : vector<2x4xf32>
    %25 = vector.shape_cast %24 : vector<2x4xf32> to vector<2x4x1xf32>
    %26 = vector.broadcast %25 : vector<2x4x1xf32> to vector<2x4x256xf32>
    %27 = arith.mulf %0, %26 : vector<2x4x256xf32>
    %c0_15 = arith.constant 0 : index
    %c0_16 = arith.constant 0 : index
    %c0_17 = arith.constant 0 : index
    %28 = vector.load %arg6[%c0_15, %c0_16, %c0_17] : memref<2x4x256xf32, #tpu.memory_space<vmem>>, vector<2x4x256xf32>
    tpu.vector_store %arg6[%c0_15, %c0_16, %c0_17], %27 {strides = array<i32>} : memref<2x4x256xf32, #tpu.memory_space<vmem>>, vector<2x4x256xf32>,
    return
  }
  func.func @transform_0(%arg0: i32) -> (i32, i32, i32) {
    %c0_i32 = arith.constant 0 : i32
    %c0_i32_0 = arith.constant 0 : i32
    %c0_i32_1 = arith.constant 0 : i32
    return %arg0, %c0_i32, %c0_i32_0 : i32, i32, i32
  }
  func.func @transform_1(%arg0: i32) -> (i32, i32) {
    %c0_i32 = arith.constant 0 : i32
    %c0_i32_0 = arith.constant 0 : i32
    %c0_i32_1 = arith.constant 0 : i32
    return %c0_i32, %c0_i32_0 : i32, i32
  }
  func.func @transform_2(%arg0: i32) -> (i32, i32) {
    %c0_i32 = arith.constant 0 : i32
    %c0_i32_0 = arith.constant 0 : i32
    %c0_i32_1 = arith.constant 0 : i32
    return %c0_i32, %c0_i32_0 : i32, i32
  }
  func.func @transform_3(%arg0: i32) -> (i32, i32) {
    %c0_i32 = arith.constant 0 : i32
    %c0_i32_0 = arith.constant 0 : i32
    %c0_i32_1 = arith.constant 0 : i32
    return %c0_i32, %c0_i32_0 : i32, i32
  }
  func.func @transform_4(%arg0: i32) -> (i32, i32) {
    %c0_i32 = arith.constant 0 : i32
    %c0_i32_0 = arith.constant 0 : i32
    %c0_i32_1 = arith.constant 0 : i32
    return %c0_i32, %c0_i32_0 : i32, i32
  }
  func.func @transform_5(%arg0: i32) -> (i32, i32, i32) {
    %c0_i32 = arith.constant 0 : i32
    %c0_i32_0 = arith.constant 0 : i32
    %c0_i32_1 = arith.constant 0 : i32
    return %arg0, %c0_i32, %c0_i32_0 : i32, i32, i32
  }
}

</mosaic_0001>

<llo_original>
// kernel: tpu_custom_call.1
$region0: #{tpu_custom_call.1}
  #allocation0 [shape = 'u32[]', space=smem, size = 0x4, offset = 0x4, fixed_abs, tag = 'smem constant byte address 0x4 - core index']
  #allocation1 [shape = 'u32[144,128]{1,0:T(1,128)}', space=vmem, size = 0x12000, scoped, tag = 'internal scratch']
  %s0 = inlined_call_operand.hbm [shape: f32[2,4,256], index: 0, kind: input, shape index: {}]
  %s1 = inlined_call_operand.vmem [shape: f32[4,2], index: 1, kind: input, shape index: {}]
  %s2 = inlined_call_operand.vmem [shape: f32[1,2], index: 2, kind: input, shape index: {}]
  %s3 = inlined_call_operand.vmem [shape: f32[2,4], index: 3, kind: input, shape index: {}]
  %s4 = inlined_call_operand.vmem [shape: f32[1,4], index: 4, kind: input, shape index: {}]
  %s5 = inlined_call_operand.hbm [shape: f32[2,4,256], index: 5, kind: output, shape index: {}]
  %s6 = sld [smem:[#allocation0]]
  $region34: #{tpu_custom_call.1} parent=0
    _
  %s8 = ssub.s32 1, %s6
  %s9 = scalar_select 0, %s8, %s6
  $region1: #{tpu_custom_call.1} parent=0
    #allocation2 [shape = 'u8[8192]{0}', space=vmem, size = 0x2000, scoped, tag = 'input window, operand 0, single buffered']
    #allocation3 [shape = 's32[1]{0}', space=sflag, size = 0x4, scoped, tag = 'scoped memory for tpu_custom_call.1']
    #allocation4 [shape = 's32[1]{0}', space=sflag, size = 0x4, scoped, tag = 'scoped memory for tpu_custom_call.1']
    #allocation5 [shape = 'u8[8192]{0}', space=vmem, size = 0x2000, scoped, tag = 'output window, operand 0, single buffered']
    %10 = vsyncpa [#allocation3], 0
    %11 = vsyncpa [#allocation4], 0
    // Predicated region
    $region2: #{tpu_custom_call.1} parent=1 // pred_check
      _
    $region3: #{tpu_custom_call.1} parent=1 // pred_check_branch
      %13 = sbr.rel (0) target = $region5
    $region4: #{tpu_custom_call.1} parent=1 // pred_region
      %s15 = ssub.s32 256, 256
      %16 = vsyncadd [#allocation3], %s15
      %s17 = sshll.u32 [#allocation2], 4
      %s18 = int_to_ptr.vmem [resolvable:$true] %s17
      %23 = dma.hbm_to_vmem [thread:$0]  %s0, 256, %s18, [#allocation3], 128, 128, 8
    $region5: #{tpu_custom_call.1} parent=1 // pred_fallthru
      _
    // Predicated region
    $region6: #{tpu_custom_call.1} parent=1 // pred_check
      _
    $region7: #{tpu_custom_call.1} parent=1 // pred_check_branch
      %25 = sbr.rel (0) target = $region9
    $region8: #{tpu_custom_call.1} parent=1 // pred_region
      _
    $region9: #{tpu_custom_call.1} parent=1 // pred_fallthru
      _
    // Predicated region
    $region10: #{tpu_custom_call.1} parent=1 // pred_check
      _
    $region11: #{tpu_custom_call.1} parent=1 // pred_check_branch
      %27 = sbr.rel (0) target = $region13
    $region12: #{tpu_custom_call.1} parent=1 // pred_region
      _
    $region13: #{tpu_custom_call.1} parent=1 // pred_fallthru
      _
    // Predicated region
    $region14: #{tpu_custom_call.1} parent=1 // pred_check
      _
    $region15: #{tpu_custom_call.1} parent=1 // pred_check_branch
      %29 = sbr.rel (0) target = $region17
    $region16: #{tpu_custom_call.1} parent=1 // pred_region
      _
    $region17: #{tpu_custom_call.1} parent=1 // pred_fallthru
      _
    // Predicated region
    $region18: #{tpu_custom_call.1} parent=1 // pred_check
      _
    $region19: #{tpu_custom_call.1} parent=1 // pred_check_branch
      %31 = sbr.rel (0) target = $region21
    $region20: #{tpu_custom_call.1} parent=1 // pred_region
      _
    $region21: #{tpu_custom_call.1} parent=1 // pred_fallthru
      _
    // Predicated region
    $region22: #{tpu_custom_call.1} parent=1 // pred_check
      _
    $region23: #{tpu_custom_call.1} parent=1 // pred_check_branch
      %33 = sbr.rel (0) target = $region25
    $region24: #{tpu_custom_call.1} parent=1 // pred_region
      %34 = dma.done [#allocation3], 256
    $region25: #{tpu_custom_call.1} parent=1 // pred_fallthru
      _
    %v35 = vld [vmem:[#allocation2] sm:$0xff]
    %v36 = vld [vmem:[#allocation2 + $0x8] sm:$0xff]
    %v39 = vcombine.high %v35, %v35
    %v40 = vcombine.high %v36, %v36
    %vm43 = vcmask 1043456
    %v44 = vsel %vm43, %v35, 0.0
    %v45 = vsel %vm43, %v39, 0.0
    %v46 = vadd.f32 %v44, %v45
    %47 = vadd.xlane.f32.xlu0 %v46
    %v48 = vpop.xlane.xlu0 %47
    %v49 = vsel %vm43, %v36, 0.0
    %v50 = vsel %vm43, %v40, 0.0
    %v51 = vadd.f32 %v49, %v50
    %52 = vadd.xlane.f32.xlu0 %v51
    %v53 = vpop.xlane.xlu0 %52
    %v54 = vmul.f32 %v48, 0.00390625
    %v55 = vmul.f32 %v53, 0.00390625
    %v56 = vld [vmem:[%s1] sm:$0xf]
    %v57 = vld [vmem:[%s2] sm:$0x1]
    %v59 = vlaneseq
    %v60 = vshrl.u32 %v59, 7
    %v61 = vsub.s32 0, %v60
    %v62 = vrot.slane %v57, %v61
    %v66 = vlaneseq
    %v67 = vand.u32 %v66, 127
    %v68 = vlaneseq
    %v69 = vshrl.u32 %v68, 7
    %v70 = vsub.s32 %v67, %v69
    %v71 = vrot.slane %v54, %v70
    %v72 = vlaneseq
    %v73 = vshrl.u32 %v72, 7
    %v74 = vsub.s32 %v67, %v73
    %v75 = vrot.slane %v55, %v74
    %vm76 = vcmask 1041409
    %v77 = vsel %vm76, %v75, %v71
    %vm78 = vcmask 31744
    %v79 = vsel %vm78, %v77, 0
    %v82 = vsel %vm43, %v56, 0
    %84 = vmatprep.subr.mxu0 0.0
    %85 = vmatpush1.msra.mxu0 %v82
    %86 = vmatprep.subr.mxu0 0.0
    %87 = vmatpush1.msra.mxu0 0.0
    %88 = vmatprep.subr.mxu0 0.0
    %89 = vmatpush1.msra.mxu0 0.0
    %90 = vmatprep.subr.mxu0 0.0
    %91 = vmatpush1.msra.mxu0 0.0
    %92 = vmatprep.subr.mxu0 0.0
    %93 = vmatpush1.msra.mxu0 0.0
    %94 = vmatprep.subr.mxu0 0.0
    %95 = vmatpush1.msra.mxu0 0.0
    %96 = vmatprep.subr.mxu0 0.0
    %97 = vmatpush1.msra.mxu0 0.0
    %98 = vmatprep.subr.mxu0 0.0
    %99 = vmatpush1.msra.mxu0 0.0
    %100 = vmatprep.subr.mxu0 0.0
    %101 = vmatpush1.msra.mxu0 0.0
    %102 = vmatprep.subr.mxu0 0.0
    %103 = vmatpush1.msra.mxu0 0.0
    %104 = vmatprep.subr.mxu0 0.0
    %105 = vmatpush1.msra.mxu0 0.0
    %106 = vmatprep.subr.mxu0 0.0
    %107 = vmatpush1.msra.mxu0 0.0
    %108 = vmatprep.subr.mxu0 0.0
    %109 = vmatpush1.msra.mxu0 0.0
    %110 = vmatprep.subr.mxu0 0.0
    %111 = vmatpush1.msra.mxu0 0.0
    %112 = vmatprep.subr.mxu0 0.0
    %113 = vmatpush1.msra.mxu0 0.0
    %114 = vmatprep.subr.mxu0 0.0
    %115 = vmatpush1.msra.mxu0 0.0
    %116 = vmatprep.subr.mxu0 0.0
    %117 = vmatpush1.msra.mxu0 0.0
    %118 = vmatprep.subr.mxu0 0.0
    %119 = vmatpush1.msra.mxu0 0.0
    %120 = vmatprep.subr.mxu0 0.0
    %121 = vmatpush1.msra.mxu0 0.0
    %122 = vmatprep.subr.mxu0 0.0
    %123 = vmatpush1.msra.mxu0 0.0
    %124 = vmatprep.subr.mxu0 0.0
    %125 = vmatpush1.msra.mxu0 0.0
    %126 = vmatprep.subr.mxu0 0.0
    %127 = vmatpush1.msra.mxu0 0.0
    %128 = vmatprep.subr.mxu0 0.0
    %129 = vmatpush1.msra.mxu0 0.0
    %130 = vmatprep.subr.mxu0 0.0
    %131 = vmatpush1.msra.mxu0 0.0
    %132 = vmatprep.subr.mxu0 0.0
    %133 = vmatpush1.msra.mxu0 0.0
    %134 = vmatprep.subr.mxu0 0.0
    %135 = vmatpush1.msra.mxu0 0.0
    %136 = vmatprep.subr.mxu0 0.0
    %137 = vmatpush1.msra.mxu0 0.0
    %138 = vmatprep.subr.mxu0 0.0
    %139 = vmatpush1.msra.mxu0 0.0
    %140 = vmatprep.subr.mxu0 0.0
    %141 = vmatpush1.msra.mxu0 0.0
    %142 = vmatprep.subr.mxu0 0.0
    %143 = vmatpush1.msra.mxu0 0.0
    %144 = vmatprep.subr.mxu0 0.0
    %145 = vmatpush1.msra.mxu0 0.0
    %146 = vmatprep.subr.mxu0 0.0
    %147 = vmatpush1.msra.mxu0 0.0
    %148 = vmatprep.mubr.f32.mxu0 0.0
    %149 = vmatmul.mubr.f32.gmra.mrb[0].mxu0 %v79
    %v150 = vpop.f32.mrb[0].mxu0
    %v151 = vadd.f32 %v62, %v150
    %v152 = vpop.f32.mrb[0].mxu0
    %153 = vdwg.mxu0
    %v154 = vxor.u32 %v151, 2147483648
    %v155 = vmul.f32 %v154, 1.442695
    %v156 = vpow.pop %v155
    %v157 = vadd.f32 %v156, 1.0
    %v158 = vrcp.pop %v157
    %v159 = vmul.f32 1.0, %v158
    %v160 = vmul.f32 %v151, %v159
    %v161 = vld [vmem:[%s3] sm:$0x3]
    %v162 = vld [vmem:[%s4] sm:$0x1]
    %v164 = vlaneseq
    %v165 = vshrl.u32 %v164, 7
    %v166 = vsub.s32 0, %v165
    %v167 = vrot.slane %v162, %v166
    %vm169 = vcmask 15360
    %v171 = vsel %vm169, %v160, 0
    %vm173 = vcmask 1041408
    %v175 = vsel %vm173, %v161, 0
    %177 = vmatprep.subr.mxu0 0.0
    %178 = vmatpush1.msra.mxu0 %v175
    %179 = vmatprep.subr.mxu0 0.0
    %180 = vmatpush1.msra.mxu0 0.0
    %181 = vmatprep.subr.mxu0 0.0
    %182 = vmatpush1.msra.mxu0 0.0
    %183 = vmatprep.subr.mxu0 0.0
    %184 = vmatpush1.msra.mxu0 0.0
    %185 = vmatprep.subr.mxu0 0.0
    %186 = vmatpush1.msra.mxu0 0.0
    %187 = vmatprep.subr.mxu0 0.0
    %188 = vmatpush1.msra.mxu0 0.0
    %189 = vmatprep.subr.mxu0 0.0
    %190 = vmatpush1.msra.mxu0 0.0
    %191 = vmatprep.subr.mxu0 0.0
    %192 = vmatpush1.msra.mxu0 0.0
    %193 = vmatprep.subr.mxu0 0.0
    %194 = vmatpush1.msra.mxu0 0.0
    %195 = vmatprep.subr.mxu0 0.0
    %196 = vmatpush1.msra.mxu0 0.0
    %197 = vmatprep.subr.mxu0 0.0
    %198 = vmatpush1.msra.mxu0 0.0
    %199 = vmatprep.subr.mxu0 0.0
    %200 = vmatpush1.msra.mxu0 0.0
    %201 = vmatprep.subr.mxu0 0.0
    %202 = vmatpush1.msra.mxu0 0.0
    %203 = vmatprep.subr.mxu0 0.0
    %204 = vmatpush1.msra.mxu0 0.0
    %205 = vmatprep.subr.mxu0 0.0
    %206 = vmatpush1.msra.mxu0 0.0
    %207 = vmatprep.subr.mxu0 0.0
    %208 = vmatpush1.msra.mxu0 0.0
    %209 = vmatprep.subr.mxu0 0.0
    %210 = vmatpush1.msra.mxu0 0.0
    %211 = vmatprep.subr.mxu0 0.0
    %212 = vmatpush1.msra.mxu0 0.0
    %213 = vmatprep.subr.mxu0 0.0
    %214 = vmatpush1.msra.mxu0 0.0
    %215 = vmatprep.subr.mxu0 0.0
    %216 = vmatpush1.msra.mxu0 0.0
    %217 = vmatprep.subr.mxu0 0.0
    %218 = vmatpush1.msra.mxu0 0.0
    %219 = vmatprep.subr.mxu0 0.0
    %220 = vmatpush1.msra.mxu0 0.0
    %221 = vmatprep.subr.mxu0 0.0
    %222 = vmatpush1.msra.mxu0 0.0
    %223 = vmatprep.subr.mxu0 0.0
    %224 = vmatpush1.msra.mxu0 0.0
    %225 = vmatprep.subr.mxu0 0.0
    %226 = vmatpush1.msra.mxu0 0.0
    %227 = vmatprep.subr.mxu0 0.0
    %228 = vmatpush1.msra.mxu0 0.0
    %229 = vmatprep.subr.mxu0 0.0
    %230 = vmatpush1.msra.mxu0 0.0
    %231 = vmatprep.subr.mxu0 0.0
    %232 = vmatpush1.msra.mxu0 0.0
    %233 = vmatprep.subr.mxu0 0.0
    %234 = vmatpush1.msra.mxu0 0.0
    %235 = vmatprep.subr.mxu0 0.0
    %236 = vmatpush1.msra.mxu0 0.0
    %237 = vmatprep.subr.mxu0 0.0
    %238 = vmatpush1.msra.mxu0 0.0
    %239 = vmatprep.subr.mxu0 0.0
    %240 = vmatpush1.msra.mxu0 0.0
    %241 = vmatprep.mubr.f32.mxu0 0.0
    %242 = vmatmul.mubr.f32.gmra.mrb[0].mxu0 %v171
    %v243 = vpop.f32.mrb[0].mxu0
    %v244 = vadd.f32 %v167, %v243
    %v245 = vpop.f32.mrb[0].mxu0
    %246 = vdwg.mxu0
    %v247 = vxor.u32 %v244, 2147483648
    %v248 = vmul.f32 %v247, 1.442695
    %v249 = vpow.pop %v248
    %v250 = vadd.f32 %v249, 1.0
    %v251 = vrcp.pop %v250
    %v252 = vmul.f32 1.0, %v251
    %v253 = vlaneseq
    %v254 = vshrl.u32 %v253, 7
    %v255 = vsub.s32 0, %v254
    %v256 = vrot.slane %v252, %v255
    %258 = vbcast.lane.b32.xlu0 %v256, 256
    %v259 = vpop.permute.xlu0 %258
    %v260 = vlaneseq
    %v261 = vshrl.u32 %v260, 7
    %v262 = vsub.s32 1, %v261
    %v263 = vrot.slane %v252, %v262
    %265 = vbcast.lane.b32.xlu0 %v263, 256
    %v266 = vpop.permute.xlu0 %265
    %v270 = vunpack.c.l.s4 839922192
    %v271 = vunpack.c.0.s8 %v270
    %v272 = vlaneseq
    %v273 = vshrl.u32 %v272, 7
    %v274 = vsub.s32 %v271, %v273
    %v275 = vrot.slane %v259, %v274
    %v277 = vunpack.c.l.s4 839922192
    %v278 = vunpack.c.0.s8 %v277
    %v279 = vlaneseq
    %v280 = vshrl.u32 %v279, 7
    %v281 = vsub.s32 %v278, %v280
    %v282 = vrot.slane %v266, %v281
    %v285 = vmul.f32 %v35, %v275
    %v286 = vmul.f32 %v36, %v282
    %287 = vst [vmem:[#allocation5] sm:$0xff] %v285
    %288 = vst [vmem:[#allocation5 + $0x8] sm:$0xff] %v286
    // Predicated region
    $region26: #{tpu_custom_call.1} parent=1 // pred_check
      _
    $region27: #{tpu_custom_call.1} parent=1 // pred_check_branch
      %290 = sbr.rel (0) target = $region29
    $region28: #{tpu_custom_call.1} parent=1 // pred_region
      %s292 = ssub.s32 256, 256
      %293 = vsyncadd [#allocation4], %s292
      %s294 = sshll.u32 [#allocation5], 4
      %s295 = int_to_ptr.vmem [resolvable:$true] %s294
      %300 = dma.vmem_to_hbm [thread:$0]  %s295, 256, %s5, [#allocation4], 128, 128, 8
    $region29: #{tpu_custom_call.1} parent=1 // pred_fallthru
      _
    // Predicated region
    $region30: #{tpu_custom_call.1} parent=1 // pred_check
      _
    $region31: #{tpu_custom_call.1} parent=1 // pred_check_branch
      %302 = sbr.rel (0) target = $region33
    $region32: #{tpu_custom_call.1} parent=1 // pred_region
      %303 = dma.done [#allocation4], 256
    $region33: #{tpu_custom_call.1} parent=1 // pred_fallthru
      _
    %304 = vsyncpa [#allocation3], 1
    %305 = vsyncpa [#allocation4], 1

</llo_original>
